<compile_context>
chip_gen: v7x
topology: tpu7x:2x2x1
jax: 0.10.0
libtpu: 0.0.40
codegen_flags: <defaults>
</compile_context>

<pallas_src>
import jax
import jax.numpy as jnp
from jax.experimental import pallas as pl
from jax.experimental.pallas import tpu as pltpu

_LANE = 128
_SUBLANE = 8
_TARGET_STEP_BYTES = 8 << 20   # streamed HBM bytes per grid step (amortizes ~0.35us/step)
_VMEM_SAFETY = 16 << 20        # headroom for Mosaic internal scratch / semaphores


def _round_up(a, b):
    return (a + b - 1) // b * b


def _vmem_capacity_bytes():
    """Physical VMEM of the current TPU generation (conservative fallback)."""
    try:
        return int(pltpu.get_tpu_info().vmem_capacity_bytes)
    except Exception:
        return 64 << 20        # v7x-sized fallback: safe on every generation


def _se_kernel(x_ref, xse_ref, w1_ref, b1_ref, w2_ref, b2_ref, o_ref):
    # conv_reduce: x_se @ W1 + b1   (weights pre-transposed to (C_in, C_out)).
    h = jnp.dot(xse_ref[...], w1_ref[...], preferred_element_type=jnp.float32)
    h = jnp.maximum(h + b1_ref[...].astype(jnp.float32), 0.0)       # act1 = ReLU
    # conv_expand: h @ W2 + b2.  Casting h to the weight dtype keeps bf16
    # weights on the native MXU path (no-op for f32); accumulation stays f32.
    g = jnp.dot(h.astype(w2_ref.dtype), w2_ref[...],
                preferred_element_type=jnp.float32)
    g = g + b2_ref[...].astype(jnp.float32)
    gate = jax.nn.sigmoid(g)                                         # exp on EUP
    # Gating multiply in the input dtype (no-op for f32; halves VPU work for bf16).
    o_ref[...] = (x_ref[...] * gate.astype(x_ref.dtype)).astype(o_ref.dtype)


def _choose_row_tile(M, Cp, itemsize, weight_buffers, tile_budget):
    """Row tile sized to a per-step HBM-traffic target, clipped to VMEM."""
    # VMEM resident per row: x/x_se/out tiles double-buffered + ~4 f32
    # temporaries (h, gate, matmul accumulators).
    per_row_vmem = 3 * 2 * Cp * itemsize + 4 * Cp * 4
    # HBM bytes streamed per row each step (x read + x_se read + out write).
    per_row_hbm = 3 * Cp * itemsize

    weight_bytes = weight_buffers * 2 * Cp * Cp * itemsize + 4 * Cp * itemsize
    avail = max(tile_budget - weight_bytes, per_row_vmem * _SUBLANE)
    max_rows_vmem = avail // per_row_vmem
    target_rows = max(_TARGET_STEP_BYTES // per_row_hbm, _SUBLANE)
    max_rows = int(min(max_rows_vmem, target_rows))

    row_tile = _SUBLANE
    for align in (256, 128, _SUBLANE):     # 256 fills v6e/v7x MXU rows, 128 v5e
        t = (max_rows // align) * align
        if t >= align:
            row_tile = int(t)
            break

    # Tiny problems collapse to one (or few) steps.
    row_tile = min(row_tile, _round_up(M, _SUBLANE))

    # Large problems: keep >= 4 grid steps so both v7x TensorCores get work
    # along the "parallel" axis (costs ~1us of extra step overhead on 1-TC chips).
    if M >= 4 * 256 and pl.cdiv(M, row_tile) < 4:
        row_tile = _round_up(pl.cdiv(M, 4), _SUBLANE)
    return int(row_tile)


@jax.jit
def se_layer_linear(x, x_se, w1_t, b1, w2_t, b2):
    """SELayer_Linear forward.

    x, x_se: (B, N, C);  w1_t, w2_t: (C, C) pre-transposed (C_in, C_out);
    b1, b2: (C,).  Returns x * sigmoid(relu(x_se @ W1 + b1) @ W2 + b2).
    """
    B, N, C = x.shape
    M = B * N
    itemsize = jnp.dtype(x.dtype).itemsize

    aligned = (C % _LANE == 0)
    Cp = C if aligned else _round_up(C, _LANE)

    # Generation-aware VMEM: ~112 MiB usable on v5e/v6e (128 MiB physical),
    # ~48 MiB on v7x (64 MiB physical).
    vmem_hard = max(_vmem_capacity_bytes() - _VMEM_SAFETY, 32 << 20)
    tile_budget = (vmem_hard * 3) // 4

    # Grid-invariant weights: single-buffer once the wasted second buffer is
    # non-negligible (>= 1 MiB); it is never refilled, so this is pure VMEM
    # reclaimed for larger row tiles.
    weight_bytes_1buf = 2 * Cp * Cp * itemsize
    single_buffer_weights = weight_bytes_1buf >= (1 << 20)
    weight_buffers = 1 if single_buffer_weights else 2
    # TODO(synk): add a channel-tiled / bf16-weight path for very large C where
    # two resident (Cp, Cp) f32 weights no longer fit VMEM (esp. v7x).

    row_tile = _choose_row_tile(M, Cp, itemsize, weight_buffers, tile_budget)
    grid = (pl.cdiv(M, row_tile),)          # tail row block masked by Pallas

    # Wrapper-side layout plumbing.  Reshape (B,N,C)->(M,C) is free; channel
    # padding (extra HBM pass) happens only on the unaligned path.
    x2 = x.reshape(M, C)
    xse2 = x_se.reshape(M, C)
    if aligned:
        w1p, w2p = w1_t, w2_t
        b1p = b1.reshape(1, C)
        b2p = b2.reshape(1, C)
    else:
        pc = Cp - C
        x2 = jnp.pad(x2, ((0, 0), (0, pc)))
        xse2 = jnp.pad(xse2, ((0, 0), (0, pc)))
        w1p = jnp.pad(w1_t, ((0, pc), (0, pc)))
        w2p = jnp.pad(w2_t, ((0, pc), (0, pc)))
        b1p = jnp.pad(b1, (0, pc)).reshape(1, Cp)
        b2p = jnp.pad(b2, (0, pc)).reshape(1, Cp)

    row_spec = pl.BlockSpec((row_tile, Cp), lambda i: (i, 0))
    if single_buffer_weights:
        w_spec = pl.BlockSpec((Cp, Cp), lambda i: (0, 0),
                              pipeline_mode=pl.Buffered(1))
    else:
        w_spec = pl.BlockSpec((Cp, Cp), lambda i: (0, 0))
    b_spec = pl.BlockSpec((1, Cp), lambda i: (0, 0))

    # VMEM actually needed: double-buffered row tiles, ~4 f32 in-kernel
    # temporaries, weights (x weight_buffers) and biases, plus 25% headroom.
    est = (3 * 2 * row_tile * Cp * itemsize
           + 4 * row_tile * Cp * 4
           + weight_buffers * weight_bytes_1buf
           + 2 * 2 * Cp * itemsize)
    vmem_limit = int(min(max(est * 5 // 4, 32 << 20), vmem_hard))

    out = pl.pallas_call(
        _se_kernel,
        out_shape=jax.ShapeDtypeStruct((M, Cp), x.dtype),
        grid_spec=pltpu.PrefetchScalarGridSpec(
            num_scalar_prefetch=0,
            grid=grid,
            in_specs=[row_spec, row_spec, w_spec, b_spec, w_spec, b_spec],
            out_specs=row_spec,
        ),
        compiler_params=pltpu.CompilerParams(
            dimension_semantics=("parallel",),   # row tiles shard across TCs
            vmem_limit_bytes=vmem_limit,
        ),
    )(x2, xse2, w1p, b1p, w2p, b2p)

    if not aligned:
        out = out[:, :C]
    return out.reshape(B, N, C)


def _reference(x, x_se, w1_t, b1, w2_t, b2):
    # HIGHEST precision so the reference matmul is true f32 (the kernel's MXU
    # f32 matmul is multi-pass / near-f32), keeping the comparison tight.
    hp = jax.lax.Precision.HIGHEST
    h = jnp.maximum(jnp.dot(x_se, w1_t, precision=hp) + b1, 0.0)
    g = jax.nn.sigmoid(jnp.dot(h, w2_t, precision=hp) + b2)
    return x * g


if __name__ == "__main__":
    key = jax.random.PRNGKey(0)
    B, N, C = 2, 8, 32  # (batch, num_sample_tokens, embed_dims)

    k_x, k_se, k_w1, k_b1, k_w2, k_b2 = jax.random.split(key, 6)
    x = jax.random.normal(k_x, (B, N, C), dtype=jnp.float32)
    x_se = jax.random.normal(k_se, (B, N, C), dtype=jnp.float32)

    # nn.Linear weight is (out, in); store pre-transposed as (in, out).
    scale = 1.0 / jnp.sqrt(jnp.float32(C))
    w1 = jax.random.uniform(k_w1, (C, C), jnp.float32, -scale, scale)
    b1 = jax.random.uniform(k_b1, (C,), jnp.float32, -scale, scale)
    w2 = jax.random.uniform(k_w2, (C, C), jnp.float32, -scale, scale)
    b2 = jax.random.uniform(k_b2, (C,), jnp.float32, -scale, scale)
    w1_t, w2_t = w1.T, w2.T

    out = jax.block_until_ready(se_layer_linear(x, x_se, w1_t, b1, w2_t, b2))

    ref = _reference(x, x_se, w1_t, b1, w2_t, b2)
    assert out.shape == (B, N, C)
    max_err = float(jnp.max(jnp.abs(out - ref)))
    assert jnp.allclose(out, ref, atol=1e-4, rtol=1e-4), max_err

    print("KERNEL_OK")
</pallas_src>

<mosaic_0001>
module attributes {stable_mosaic.version = 11 : i64} {
  func.func @_se_kernel(%arg0: i32, %arg1: memref<16x128xf32, #tpu.memory_space<vmem>>, %arg2: memref<16x128xf32, #tpu.memory_space<vmem>>, %arg3: memref<128x128xf32, #tpu.memory_space<vmem>>, %arg4: memref<1x128xf32, #tpu.memory_space<vmem>>, %arg5: memref<128x128xf32, #tpu.memory_space<vmem>>, %arg6: memref<1x128xf32, #tpu.memory_space<vmem>>, %arg7: memref<16x128xf32, #tpu.memory_space<vmem>>) attributes {dimension_semantics = [#tpu.dimension_semantics<parallel>], iteration_bounds = array<i64: 1>, scalar_prefetch = 0 : i64, scratch_operands = 0 : i64, tpu.core_type = #tpu.core_type<tc>, window_params = [{transform_indices = @transform_0, window_bounds = array<i64: 16, 128>}, {transform_indices = @transform_1, window_bounds = array<i64: 16, 128>}, {pipeline_mode = #tpu.pipeline_mode<synchronous>, transform_indices = @transform_2, window_bounds = array<i64: 128, 128>}, {pipeline_mode = #tpu.pipeline_mode<synchronous>, transform_indices = @transform_3, window_bounds = array<i64: 1, 128>}, {pipeline_mode = #tpu.pipeline_mode<synchronous>, transform_indices = @transform_4, window_bounds = array<i64: 128, 128>}, {pipeline_mode = #tpu.pipeline_mode<synchronous>, transform_indices = @transform_5, window_bounds = array<i64: 1, 128>}, {transform_indices = @transform_6, window_bounds = array<i64: 16, 128>}]} {
    %c0 = arith.constant 0 : index
    %c0_0 = arith.constant 0 : index
    %0 = vector.load %arg2[%c0, %c0_0] : memref<16x128xf32, #tpu.memory_space<vmem>>, vector<16x128xf32>
    %c0_1 = arith.constant 0 : index
    %c0_2 = arith.constant 0 : index
    %1 = vector.load %arg3[%c0_1, %c0_2] : memref<128x128xf32, #tpu.memory_space<vmem>>, vector<128x128xf32>
    %cst = arith.constant dense<0.000000e+00> : vector<16x128xf32>
    %2 = tpu.matmul %0, %1, %cst {dimension_numbers = #tpu.dot_dimension_numbers<[1], [0], [0], [1], [0, 0, 1, 1], [], []>} : vector<16x128xf32>, vector<128x128xf32>, vector<16x128xf32> -> vector<16x128xf32>
    %c0_3 = arith.constant 0 : index
    %c0_4 = arith.constant 0 : index
    %3 = vector.load %arg4[%c0_3, %c0_4] : memref<1x128xf32, #tpu.memory_space<vmem>>, vector<1x128xf32>
    %4 = vector.broadcast %3 : vector<1x128xf32> to vector<16x128xf32>
    %5 = arith.addf %2, %4 : vector<16x128xf32>
    %cst_5 = arith.constant 0.000000e+00 : f32
    %6 = vector.broadcast %cst_5 : f32 to vector<16x128xf32>
    %7 = arith.maximumf %5, %6 : vector<16x128xf32>
    %c0_6 = arith.constant 0 : index
    %c0_7 = arith.constant 0 : index
    %8 = vector.load %arg5[%c0_6, %c0_7] : memref<128x128xf32, #tpu.memory_space<vmem>>, vector<128x128xf32>
    %cst_8 = arith.constant dense<0.000000e+00> : vector<16x128xf32>
    %9 = tpu.matmul %7, %8, %cst_8 {dimension_numbers = #tpu.dot_dimension_numbers<[1], [0], [0], [1], [0, 0, 1, 1], [], []>} : vector<16x128xf32>, vector<128x128xf32>, vector<16x128xf32> -> vector<16x128xf32>
    %c0_9 = arith.constant 0 : index
    %c0_10 = arith.constant 0 : index
    %10 = vector.load %arg6[%c0_9, %c0_10] : memref<1x128xf32, #tpu.memory_space<vmem>>, vector<1x128xf32>
    %11 = vector.broadcast %10 : vector<1x128xf32> to vector<16x128xf32>
    %12 = arith.addf %9, %11 : vector<16x128xf32>
    %13 = arith.negf %12 : vector<16x128xf32>
    %14 = math.exp %13 : vector<16x128xf32>
    %cst_11 = arith.constant 1.000000e+00 : f32
    %15 = vector.broadcast %cst_11 : f32 to vector<16x128xf32>
    %16 = arith.addf %15, %14 : vector<16x128xf32>
    %17 = arith.divf %15, %16 : vector<16x128xf32>
    %c0_12 = arith.constant 0 : index
    %c0_13 = arith.constant 0 : index
    %18 = vector.load %arg1[%c0_12, %c0_13] : memref<16x128xf32, #tpu.memory_space<vmem>>, vector<16x128xf32>
    %19 = arith.mulf %18, %17 : vector<16x128xf32>
    %c0_14 = arith.constant 0 : index
    %c0_15 = arith.constant 0 : index
    %20 = vector.load %arg7[%c0_14, %c0_15] : memref<16x128xf32, #tpu.memory_space<vmem>>, vector<16x128xf32>
    tpu.vector_store %arg7[%c0_14, %c0_15], %19 {strides = array<i32>} : memref<16x128xf32, #tpu.memory_space<vmem>>, vector<16x128xf32>,
    return
  }
  func.func @transform_0(%arg0: i32) -> (i32, i32) {
    %c0_i32 = arith.constant 0 : i32
    %c0_i32_0 = arith.constant 0 : i32
    return %arg0, %c0_i32 : i32, i32
  }
  func.func @transform_1(%arg0: i32) -> (i32, i32) {
    %c0_i32 = arith.constant 0 : i32
    %c0_i32_0 = arith.constant 0 : i32
    return %arg0, %c0_i32 : i32, i32
  }
  func.func @transform_2(%arg0: i32) -> (i32, i32) {
    %c0_i32 = arith.constant 0 : i32
    %c0_i32_0 = arith.constant 0 : i32
    %c0_i32_1 = arith.constant 0 : i32
    return %c0_i32, %c0_i32_0 : i32, i32
  }
  func.func @transform_3(%arg0: i32) -> (i32, i32) {
    %c0_i32 = arith.constant 0 : i32
    %c0_i32_0 = arith.constant 0 : i32
    %c0_i32_1 = arith.constant 0 : i32
    return %c0_i32, %c0_i32_0 : i32, i32
  }
  func.func @transform_4(%arg0: i32) -> (i32, i32) {
    %c0_i32 = arith.constant 0 : i32
    %c0_i32_0 = arith.constant 0 : i32
    %c0_i32_1 = arith.constant 0 : i32
    return %c0_i32, %c0_i32_0 : i32, i32
  }
  func.func @transform_5(%arg0: i32) -> (i32, i32) {
    %c0_i32 = arith.constant 0 : i32
    %c0_i32_0 = arith.constant 0 : i32
    %c0_i32_1 = arith.constant 0 : i32
    return %c0_i32, %c0_i32_0 : i32, i32
  }
  func.func @transform_6(%arg0: i32) -> (i32, i32) {
    %c0_i32 = arith.constant 0 : i32
    %c0_i32_0 = arith.constant 0 : i32
    return %arg0, %c0_i32 : i32, i32
  }
}

</mosaic_0001>

<llo_original>
// kernel: se_layer_linear.1
$region0: #{se_layer_linear.1}
  #allocation0 [shape = 'u32[]', space=smem, size = 0x4, offset = 0x4, fixed_abs, tag = 'smem constant byte address 0x4 - core index']
  #allocation1 [shape = 'u32[144,128]{1,0:T(1,128)}', space=vmem, size = 0x12000, scoped, tag = 'internal scratch']
  %s0 = inlined_call_operand.vmem [shape: f32[16,128], index: 0, kind: input, shape index: {}]
  %s1 = inlined_call_operand.vmem [shape: f32[16,128], index: 1, kind: input, shape index: {}]
  %s2 = inlined_call_operand.vmem [shape: f32[128,128], index: 2, kind: input, shape index: {}]
  %s3 = inlined_call_operand.vmem [shape: f32[1,128], index: 3, kind: input, shape index: {}]
  %s4 = inlined_call_operand.vmem [shape: f32[128,128], index: 4, kind: input, shape index: {}]
  %s5 = inlined_call_operand.vmem [shape: f32[1,128], index: 5, kind: input, shape index: {}]
  %s6 = inlined_call_operand.vmem [shape: f32[16,128], index: 6, kind: output, shape index: {}]
  %s7 = sld [smem:[#allocation0]]
  $region34: #{se_layer_linear.1} parent=0
    _
  %s9 = ssub.s32 1, %s7
  %s10 = scalar_select 0, %s9, %s7
  // Predicated region
  $region2: #{se_layer_linear.1} parent=0 // pred_check
    _
  $region3: #{se_layer_linear.1} parent=0 // pred_check_branch
    %12 = sbr.rel (0) target = $region5
  $region4: #{se_layer_linear.1} parent=0 // pred_region
    _
  $region5: #{se_layer_linear.1} parent=0 // pred_fallthru
    _
  // Predicated region
  $region6: #{se_layer_linear.1} parent=0 // pred_check
    _
  $region7: #{se_layer_linear.1} parent=0 // pred_check_branch
    %14 = sbr.rel (0) target = $region9
  $region8: #{se_layer_linear.1} parent=0 // pred_region
    _
  $region9: #{se_layer_linear.1} parent=0 // pred_fallthru
    _
  // Predicated region
  $region10: #{se_layer_linear.1} parent=0 // pred_check
    _
  $region11: #{se_layer_linear.1} parent=0 // pred_check_branch
    %16 = sbr.rel (0) target = $region13
  $region12: #{se_layer_linear.1} parent=0 // pred_region
    _
  $region13: #{se_layer_linear.1} parent=0 // pred_fallthru
    _
  // Predicated region
  $region14: #{se_layer_linear.1} parent=0 // pred_check
    _
  $region15: #{se_layer_linear.1} parent=0 // pred_check_branch
    %18 = sbr.rel (0) target = $region17
  $region16: #{se_layer_linear.1} parent=0 // pred_region
    _
  $region17: #{se_layer_linear.1} parent=0 // pred_fallthru
    _
  // Predicated region
  $region18: #{se_layer_linear.1} parent=0 // pred_check
    _
  $region19: #{se_layer_linear.1} parent=0 // pred_check_branch
    %20 = sbr.rel (0) target = $region21
  $region20: #{se_layer_linear.1} parent=0 // pred_region
    _
  $region21: #{se_layer_linear.1} parent=0 // pred_fallthru
    _
  // Predicated region
  $region22: #{se_layer_linear.1} parent=0 // pred_check
    _
  $region23: #{se_layer_linear.1} parent=0 // pred_check_branch
    %22 = sbr.rel (0) target = $region25
  $region24: #{se_layer_linear.1} parent=0 // pred_region
    _
  $region25: #{se_layer_linear.1} parent=0 // pred_fallthru
    _
  %v23 = vld [vmem:[%s1] sm:$0xff]
  %v24 = vld [vmem:[%s1 + $0x8] sm:$0xff]
  %v25 = vld [vmem:[%s2] sm:$0xff]
  %v26 = vld [vmem:[%s2 + $0x8] sm:$0xff]
  %v27 = vld [vmem:[%s2 + $0x10] sm:$0xff]
  %v28 = vld [vmem:[%s2 + $0x18] sm:$0xff]
  %v29 = vld [vmem:[%s2 + $0x20] sm:$0xff]
  %v30 = vld [vmem:[%s2 + $0x28] sm:$0xff]
  %v31 = vld [vmem:[%s2 + $0x30] sm:$0xff]
  %v32 = vld [vmem:[%s2 + $0x38] sm:$0xff]
  %v33 = vld [vmem:[%s2 + $0x40] sm:$0xff]
  %v34 = vld [vmem:[%s2 + $0x48] sm:$0xff]
  %v35 = vld [vmem:[%s2 + $0x50] sm:$0xff]
  %v36 = vld [vmem:[%s2 + $0x58] sm:$0xff]
  %v37 = vld [vmem:[%s2 + $0x60] sm:$0xff]
  %v38 = vld [vmem:[%s2 + $0x68] sm:$0xff]
  %v39 = vld [vmem:[%s2 + $0x70] sm:$0xff]
  %v40 = vld [vmem:[%s2 + $0x78] sm:$0xff]
  %v41 = vld [vmem:[%s3] sm:$0x1]
  %v43 = vlaneseq
  %v44 = vshrl.u32 %v43, 7
  %v45 = vsub.s32 0, %v44
  %v46 = vrot.slane %v41, %v45
  %48 = vmatprep.subr.mxu0 0.0
  %49 = vmatpush1.msra.mxu0 %v25
  %50 = vmatprep.subr.mxu0 0.0
  %51 = vmatpush1.msra.mxu0 %v26
  %52 = vmatprep.subr.mxu0 0.0
  %53 = vmatpush1.msra.mxu0 %v27
  %54 = vmatprep.subr.mxu0 0.0
  %55 = vmatpush1.msra.mxu0 %v28
  %56 = vmatprep.subr.mxu0 0.0
  %57 = vmatpush1.msra.mxu0 %v29
  %58 = vmatprep.subr.mxu0 0.0
  %59 = vmatpush1.msra.mxu0 %v30
  %60 = vmatprep.subr.mxu0 0.0
  %61 = vmatpush1.msra.mxu0 %v31
  %62 = vmatprep.subr.mxu0 0.0
  %63 = vmatpush1.msra.mxu0 %v32
  %64 = vmatprep.subr.mxu0 0.0
  %65 = vmatpush1.msra.mxu0 %v33
  %66 = vmatprep.subr.mxu0 0.0
  %67 = vmatpush1.msra.mxu0 %v34
  %68 = vmatprep.subr.mxu0 0.0
  %69 = vmatpush1.msra.mxu0 %v35
  %70 = vmatprep.subr.mxu0 0.0
  %71 = vmatpush1.msra.mxu0 %v36
  %72 = vmatprep.subr.mxu0 0.0
  %73 = vmatpush1.msra.mxu0 %v37
  %74 = vmatprep.subr.mxu0 0.0
  %75 = vmatpush1.msra.mxu0 %v38
  %76 = vmatprep.subr.mxu0 0.0
  %77 = vmatpush1.msra.mxu0 %v39
  %78 = vmatprep.subr.mxu0 0.0
  %79 = vmatpush1.msra.mxu0 %v40
  %80 = vmatprep.subr.mxu0 0.0
  %81 = vmatpush1.msra.mxu0 0.0
  %82 = vmatprep.subr.mxu0 0.0
  %83 = vmatpush1.msra.mxu0 0.0
  %84 = vmatprep.subr.mxu0 0.0
  %85 = vmatpush1.msra.mxu0 0.0
  %86 = vmatprep.subr.mxu0 0.0
  %87 = vmatpush1.msra.mxu0 0.0
  %88 = vmatprep.subr.mxu0 0.0
  %89 = vmatpush1.msra.mxu0 0.0
  %90 = vmatprep.subr.mxu0 0.0
  %91 = vmatpush1.msra.mxu0 0.0
  %92 = vmatprep.subr.mxu0 0.0
  %93 = vmatpush1.msra.mxu0 0.0
  %94 = vmatprep.subr.mxu0 0.0
  %95 = vmatpush1.msra.mxu0 0.0
  %96 = vmatprep.subr.mxu0 0.0
  %97 = vmatpush1.msra.mxu0 0.0
  %98 = vmatprep.subr.mxu0 0.0
  %99 = vmatpush1.msra.mxu0 0.0
  %100 = vmatprep.subr.mxu0 0.0
  %101 = vmatpush1.msra.mxu0 0.0
  %102 = vmatprep.subr.mxu0 0.0
  %103 = vmatpush1.msra.mxu0 0.0
  %104 = vmatprep.subr.mxu0 0.0
  %105 = vmatpush1.msra.mxu0 0.0
  %106 = vmatprep.subr.mxu0 0.0
  %107 = vmatpush1.msra.mxu0 0.0
  %108 = vmatprep.subr.mxu0 0.0
  %109 = vmatpush1.msra.mxu0 0.0
  %110 = vmatprep.subr.mxu0 0.0
  %111 = vmatpush1.msra.mxu0 0.0
  %112 = vmatprep.mubr.f32.mxu0 0.0
  %113 = vmatmul.mubr.f32.gmra.mrb[0].mxu0 %v23
  %v114 = vpop.f32.mrb[0].mxu0
  %v115 = vadd.f32 %v46, %v114
  %v116 = vpop.f32.mrb[0].mxu0
  %117 = vmatprep.mubr.f32.mxu0 0.0
  %118 = vmatmul.mubr.f32.gmra.mrb[0].mxu0 %v24
  %v119 = vpop.f32.mrb[0].mxu0
  %v120 = vadd.f32 %v46, %v119
  %v121 = vpop.f32.mrb[0].mxu0
  %122 = vdwg.mxu0
  %v123 = vmax.f32 %v115, 0.0
  %v124 = vmax.f32 %v120, 0.0
  %v125 = vld [vmem:[%s4] sm:$0xff]
  %v126 = vld [vmem:[%s4 + $0x8] sm:$0xff]
  %v127 = vld [vmem:[%s4 + $0x10] sm:$0xff]
  %v128 = vld [vmem:[%s4 + $0x18] sm:$0xff]
  %v129 = vld [vmem:[%s4 + $0x20] sm:$0xff]
  %v130 = vld [vmem:[%s4 + $0x28] sm:$0xff]
  %v131 = vld [vmem:[%s4 + $0x30] sm:$0xff]
  %v132 = vld [vmem:[%s4 + $0x38] sm:$0xff]
  %v133 = vld [vmem:[%s4 + $0x40] sm:$0xff]
  %v134 = vld [vmem:[%s4 + $0x48] sm:$0xff]
  %v135 = vld [vmem:[%s4 + $0x50] sm:$0xff]
  %v136 = vld [vmem:[%s4 + $0x58] sm:$0xff]
  %v137 = vld [vmem:[%s4 + $0x60] sm:$0xff]
  %v138 = vld [vmem:[%s4 + $0x68] sm:$0xff]
  %v139 = vld [vmem:[%s4 + $0x70] sm:$0xff]
  %v140 = vld [vmem:[%s4 + $0x78] sm:$0xff]
  %v141 = vld [vmem:[%s5] sm:$0x1]
  %v143 = vlaneseq
  %v144 = vshrl.u32 %v143, 7
  %v145 = vsub.s32 0, %v144
  %v146 = vrot.slane %v141, %v145
  %148 = vmatprep.subr.mxu0 0.0
  %149 = vmatpush1.msra.mxu0 %v125
  %150 = vmatprep.subr.mxu0 0.0
  %151 = vmatpush1.msra.mxu0 %v126
  %152 = vmatprep.subr.mxu0 0.0
  %153 = vmatpush1.msra.mxu0 %v127
  %154 = vmatprep.subr.mxu0 0.0
  %155 = vmatpush1.msra.mxu0 %v128
  %156 = vmatprep.subr.mxu0 0.0
  %157 = vmatpush1.msra.mxu0 %v129
  %158 = vmatprep.subr.mxu0 0.0
  %159 = vmatpush1.msra.mxu0 %v130
  %160 = vmatprep.subr.mxu0 0.0
  %161 = vmatpush1.msra.mxu0 %v131
  %162 = vmatprep.subr.mxu0 0.0
  %163 = vmatpush1.msra.mxu0 %v132
  %164 = vmatprep.subr.mxu0 0.0
  %165 = vmatpush1.msra.mxu0 %v133
  %166 = vmatprep.subr.mxu0 0.0
  %167 = vmatpush1.msra.mxu0 %v134
  %168 = vmatprep.subr.mxu0 0.0
  %169 = vmatpush1.msra.mxu0 %v135
  %170 = vmatprep.subr.mxu0 0.0
  %171 = vmatpush1.msra.mxu0 %v136
  %172 = vmatprep.subr.mxu0 0.0
  %173 = vmatpush1.msra.mxu0 %v137
  %174 = vmatprep.subr.mxu0 0.0
  %175 = vmatpush1.msra.mxu0 %v138
  %176 = vmatprep.subr.mxu0 0.0
  %177 = vmatpush1.msra.mxu0 %v139
  %178 = vmatprep.subr.mxu0 0.0
  %179 = vmatpush1.msra.mxu0 %v140
  %180 = vmatprep.subr.mxu0 0.0
  %181 = vmatpush1.msra.mxu0 0.0
  %182 = vmatprep.subr.mxu0 0.0
  %183 = vmatpush1.msra.mxu0 0.0
  %184 = vmatprep.subr.mxu0 0.0
  %185 = vmatpush1.msra.mxu0 0.0
  %186 = vmatprep.subr.mxu0 0.0
  %187 = vmatpush1.msra.mxu0 0.0
  %188 = vmatprep.subr.mxu0 0.0
  %189 = vmatpush1.msra.mxu0 0.0
  %190 = vmatprep.subr.mxu0 0.0
  %191 = vmatpush1.msra.mxu0 0.0
  %192 = vmatprep.subr.mxu0 0.0
  %193 = vmatpush1.msra.mxu0 0.0
  %194 = vmatprep.subr.mxu0 0.0
  %195 = vmatpush1.msra.mxu0 0.0
  %196 = vmatprep.subr.mxu0 0.0
  %197 = vmatpush1.msra.mxu0 0.0
  %198 = vmatprep.subr.mxu0 0.0
  %199 = vmatpush1.msra.mxu0 0.0
  %200 = vmatprep.subr.mxu0 0.0
  %201 = vmatpush1.msra.mxu0 0.0
  %202 = vmatprep.subr.mxu0 0.0
  %203 = vmatpush1.msra.mxu0 0.0
  %204 = vmatprep.subr.mxu0 0.0
  %205 = vmatpush1.msra.mxu0 0.0
  %206 = vmatprep.subr.mxu0 0.0
  %207 = vmatpush1.msra.mxu0 0.0
  %208 = vmatprep.subr.mxu0 0.0
  %209 = vmatpush1.msra.mxu0 0.0
  %210 = vmatprep.subr.mxu0 0.0
  %211 = vmatpush1.msra.mxu0 0.0
  %212 = vmatprep.mubr.f32.mxu0 0.0
  %213 = vmatmul.mubr.f32.gmra.mrb[0].mxu0 %v123
  %v214 = vpop.f32.mrb[0].mxu0
  %v215 = vadd.f32 %v146, %v214
  %v216 = vpop.f32.mrb[0].mxu0
  %217 = vmatprep.mubr.f32.mxu0 0.0
  %218 = vmatmul.mubr.f32.gmra.mrb[0].mxu0 %v124
  %v219 = vpop.f32.mrb[0].mxu0
  %v220 = vadd.f32 %v146, %v219
  %v221 = vpop.f32.mrb[0].mxu0
  %222 = vdwg.mxu0
  %v223 = vxor.u32 %v215, 2147483648
  %v224 = vxor.u32 %v220, 2147483648
  %v225 = vmul.f32 %v223, 1.442695
  %v226 = vpow.pop %v225
  %v227 = vmul.f32 %v224, 1.442695
  %v228 = vpow.pop %v227
  %v229 = vadd.f32 %v226, 1.0
  %v230 = vadd.f32 %v228, 1.0
  %v231 = vrcp.pop %v229
  %v232 = vmul.f32 1.0, %v231
  %v233 = vrcp.pop %v230
  %v234 = vmul.f32 1.0, %v233
  %v235 = vld [vmem:[%s0] sm:$0xff]
  %v236 = vld [vmem:[%s0 + $0x8] sm:$0xff]
  %v237 = vmul.f32 %v235, %v232
  %v238 = vmul.f32 %v236, %v234
  %239 = vst [vmem:[%s6] sm:$0xff] %v237
  %240 = vst [vmem:[%s6 + $0x8] sm:$0xff] %v238
  // Predicated region
  $region26: #{se_layer_linear.1} parent=0 // pred_check
    _
  $region27: #{se_layer_linear.1} parent=0 // pred_check_branch
    %242 = sbr.rel (0) target = $region29
  $region28: #{se_layer_linear.1} parent=0 // pred_region
    _
  $region29: #{se_layer_linear.1} parent=0 // pred_fallthru
    _
  // Predicated region
  $region30: #{se_layer_linear.1} parent=0 // pred_check
    _
  $region31: #{se_layer_linear.1} parent=0 // pred_check_branch
    %244 = sbr.rel (0) target = $region33
  $region32: #{se_layer_linear.1} parent=0 // pred_region
    _
  $region33: #{se_layer_linear.1} parent=0 // pred_fallthru
    _

</llo_original>
